<compile_context>
chip_gen: v7x
topology: tpu7x:2x2x1
jax: 0.10.0
libtpu: 0.0.40
codegen_flags: <defaults>
</compile_context>

<pallas_src>
import functools

import jax
import jax.numpy as jnp
from jax.experimental import pallas as pl
from jax.experimental.pallas import tpu as pltpu


def _linear_kernel(x_ref, wt_ref, b_ref, o_ref):
    # y = x @ Wt + b ; MXU inputs in the weight's dtype (f32 or bf16),
    # accumulation always in f32.
    x = x_ref[...].astype(wt_ref.dtype)
    y = jnp.dot(x, wt_ref[...], preferred_element_type=jnp.float32)
    o_ref[...] = (y + b_ref[...]).astype(o_ref.dtype)


def prepare_params(w, b, *, compute_dtype=None):
    """One-time (param-load time) conversion of PyTorch-layout Linear params.

    w: (256, 1280) PyTorch layout -> wt: (1280, 256), MXU-ready (no per-call
    transpose inside jit).  b -> (1, 256) f32 row for broadcasting.
    compute_dtype=jnp.bfloat16 stores the weight in bf16 for the fast MXU path.
    """
    wt = jnp.asarray(w).T
    if compute_dtype is not None:
        wt = wt.astype(compute_dtype)
    b2 = jnp.asarray(b, dtype=jnp.float32).reshape(1, -1)
    return wt, b2


def _round_up8(v: int) -> int:
    return max(8, ((v + 7) // 8) * 8)


def _pick_tile_n(n_rows: int) -> int:
    # Large N: 512-row tiles (x tile 2.5 MiB f32) -> >=3 pipelined grid steps,
    # ~85%+ of HBM roofline, fits every generation's default scoped VMEM.
    if n_rows > 1024:
        return 512
    # Mid-size N: split into (at least) 2 tiles so the "parallel" row axis
    # actually feeds both v7x TensorCores and the DMA/compute pipeline.
    if n_rows > 256:
        return _round_up8(pl.cdiv(n_rows, 2))
    # Small N: a single sublane-aligned tile.
    return _round_up8(n_rows)


@functools.partial(jax.jit, static_argnames=("tile_n", "force_pallas"))
def attention_model_bak_forward(x, wt, b2, *, tile_n=None, force_pallas=False):
    """x: (1, N, 1280) or (N, 1280); (wt, b2) from prepare_params().
    Returns (N, 256) = Linear(x.squeeze(0))."""
    if x.ndim == 3:
        x = jnp.squeeze(x, axis=0)          # x.squeeze(0)
    n, l = x.shape
    d = wt.shape[1]
    out_dtype = x.dtype

    # Tiny-N fast path: kernel-launch + pipeline overhead exceeds the ~0.3
    # MFLOP of compute; a fused XLA dot is strictly cheaper.
    if not force_pallas and n < 256:
        y = jnp.dot(x.astype(wt.dtype), wt, preferred_element_type=jnp.float32)
        return (y + b2).astype(out_dtype)

    if tile_n is None:
        tile_n = _pick_tile_n(n)

    grid = (pl.cdiv(n, tile_n),)            # partial last block masked by Pallas

    out = pl.pallas_call(
        _linear_kernel,
        out_shape=jax.ShapeDtypeStruct((n, d), out_dtype),
        grid_spec=pltpu.PrefetchScalarGridSpec(
            num_scalar_prefetch=0,
            grid=grid,
            in_specs=[
                # x row tile: double-buffered stream, overlapped with compute.
                pl.BlockSpec((tile_n, l), lambda i: (i, 0)),
                # Wt fully resident; constant block index -> single buffer.
                pl.BlockSpec((l, d), lambda i: (0, 0),
                             pipeline_mode=pl.Buffered(1)),
                # bias row.
                pl.BlockSpec((1, d), lambda i: (0, 0)),
            ],
            out_specs=pl.BlockSpec((tile_n, d), lambda i: (i, 0)),
        ),
        compiler_params=pltpu.CompilerParams(
            dimension_semantics=("parallel",),   # row tiles split across TCs
        ),
    )(x, wt, b2)
    return out


if __name__ == "__main__":
    L, D = 1280, 256          # fixed by the module: nn.Linear(1280, 256)
    N = 16                    # small number of instances

    key = jax.random.PRNGKey(0)
    kx, kw, kx2 = jax.random.split(key, 3)

    x = jax.random.normal(kx, (1, N, L), dtype=jnp.float32)
    # xavier_uniform-style weight init; bias is zero per the module initializer.
    bound = (6.0 / (L + D)) ** 0.5
    w = jax.random.uniform(kw, (D, L), dtype=jnp.float32, minval=-bound, maxval=bound)
    b = jnp.zeros((D,), dtype=jnp.float32)

    # Pure-JAX reference (PyTorch Linear semantics).
    y_ref = jnp.squeeze(x, 0) @ w.T + b

    # --- f32 Pallas path (forced, to exercise the kernel at demo size) ------
    wt32, b2 = prepare_params(w, b)
    y = attention_model_bak_forward(x, wt32, b2, force_pallas=True)
    jax.block_until_ready(y)
    assert y.shape == (N, D)
    assert jnp.allclose(y, y_ref, atol=1e-4, rtol=1e-4)

    # --- bf16-weight MXU path, f32 accumulation (looser tolerance) ----------
    wt16, _ = prepare_params(w, b, compute_dtype=jnp.bfloat16)
    y16 = attention_model_bak_forward(x, wt16, b2, force_pallas=True)
    jax.block_until_ready(y16)
    assert jnp.allclose(y16, y_ref, atol=5e-2, rtol=5e-2)

    # --- masked partial final block (N not divisible by tile_n, no padding) -
    x2 = jax.random.normal(kx2, (1, 20, L), dtype=jnp.float32)
    y2 = attention_model_bak_forward(x2, wt32, b2, tile_n=8, force_pallas=True)
    jax.block_until_ready(y2)
    y2_ref = jnp.squeeze(x2, 0) @ w.T + b
    assert y2.shape == (20, D)
    assert jnp.allclose(y2, y2_ref, atol=1e-4, rtol=1e-4)

    # --- tiny-N XLA fast path (no Pallas launch) -----------------------------
    y_fast = attention_model_bak_forward(x, wt32, b2)
    jax.block_until_ready(y_fast)
    assert jnp.allclose(y_fast, y_ref, atol=1e-4, rtol=1e-4)

    print("KERNEL_OK")
</pallas_src>

<mosaic_0001>
module attributes {stable_mosaic.version = 11 : i64} {
  func.func @_linear_kernel(%arg0: i32, %arg1: memref<16x1280xf32, #tpu.memory_space<vmem>>, %arg2: memref<1280x256xf32, #tpu.memory_space<vmem>>, %arg3: memref<1x256xf32, #tpu.memory_space<vmem>>, %arg4: memref<16x256xf32, #tpu.memory_space<vmem>>) attributes {dimension_semantics = [#tpu.dimension_semantics<parallel>], iteration_bounds = array<i64: 1>, scalar_prefetch = 0 : i64, scratch_operands = 0 : i64, tpu.core_type = #tpu.core_type<tc>, window_params = [{transform_indices = @transform_0, window_bounds = array<i64: 16, 1280>}, {pipeline_mode = #tpu.pipeline_mode<synchronous>, transform_indices = @transform_1, window_bounds = array<i64: 1280, 256>}, {pipeline_mode = #tpu.pipeline_mode<synchronous>, transform_indices = @transform_2, window_bounds = array<i64: 1, 256>}, {transform_indices = @transform_3, window_bounds = array<i64: 16, 256>}]} {
    %c0 = arith.constant 0 : index
    %c0_0 = arith.constant 0 : index
    %0 = vector.load %arg1[%c0, %c0_0] : memref<16x1280xf32, #tpu.memory_space<vmem>>, vector<16x1280xf32>
    %c0_1 = arith.constant 0 : index
    %c0_2 = arith.constant 0 : index
    %1 = vector.load %arg2[%c0_1, %c0_2] : memref<1280x256xf32, #tpu.memory_space<vmem>>, vector<1280x256xf32>
    %cst = arith.constant dense<0.000000e+00> : vector<16x256xf32>
    %2 = tpu.matmul %0, %1, %cst {dimension_numbers = #tpu.dot_dimension_numbers<[1], [0], [0], [1], [0, 0, 1, 1], [], []>} : vector<16x1280xf32>, vector<1280x256xf32>, vector<16x256xf32> -> vector<16x256xf32>
    %c0_3 = arith.constant 0 : index
    %c0_4 = arith.constant 0 : index
    %3 = vector.load %arg3[%c0_3, %c0_4] : memref<1x256xf32, #tpu.memory_space<vmem>>, vector<1x256xf32>
    %4 = vector.broadcast %3 : vector<1x256xf32> to vector<16x256xf32>
    %5 = arith.addf %2, %4 : vector<16x256xf32>
    %c0_5 = arith.constant 0 : index
    %c0_6 = arith.constant 0 : index
    %6 = vector.load %arg4[%c0_5, %c0_6] : memref<16x256xf32, #tpu.memory_space<vmem>>, vector<16x256xf32>
    tpu.vector_store %arg4[%c0_5, %c0_6], %5 {strides = array<i32>} : memref<16x256xf32, #tpu.memory_space<vmem>>, vector<16x256xf32>,
    return
  }
  func.func @transform_0(%arg0: i32) -> (i32, i32) {
    %c0_i32 = arith.constant 0 : i32
    %c0_i32_0 = arith.constant 0 : i32
    return %arg0, %c0_i32 : i32, i32
  }
  func.func @transform_1(%arg0: i32) -> (i32, i32) {
    %c0_i32 = arith.constant 0 : i32
    %c0_i32_0 = arith.constant 0 : i32
    %c0_i32_1 = arith.constant 0 : i32
    return %c0_i32, %c0_i32_0 : i32, i32
  }
  func.func @transform_2(%arg0: i32) -> (i32, i32) {
    %c0_i32 = arith.constant 0 : i32
    %c0_i32_0 = arith.constant 0 : i32
    %c0_i32_1 = arith.constant 0 : i32
    return %c0_i32, %c0_i32_0 : i32, i32
  }
  func.func @transform_3(%arg0: i32) -> (i32, i32) {
    %c0_i32 = arith.constant 0 : i32
    %c0_i32_0 = arith.constant 0 : i32
    return %arg0, %c0_i32 : i32, i32
  }
}

</mosaic_0001>

<llo_original>
// kernel: attention_model_bak_forward.1
$region0: #{attention_model_bak_forward.1}
  #allocation0 [shape = 'u32[]', space=smem, size = 0x4, offset = 0x4, fixed_abs, tag = 'smem constant byte address 0x4 - core index']
  #allocation1 [shape = 'u32[144,128]{1,0:T(1,128)}', space=vmem, size = 0x12000, scoped, tag = 'internal scratch']
  %s0 = inlined_call_operand.hbm [shape: f32[16,1280], index: 0, kind: input, shape index: {}]
  %s1 = inlined_call_operand.hbm [shape: f32[1280,256], index: 1, kind: input, shape index: {}]
  %s2 = inlined_call_operand.hbm [shape: f32[1,256], index: 2, kind: input, shape index: {}]
  %s3 = inlined_call_operand.hbm [shape: f32[16,256], index: 3, kind: output, shape index: {}]
  %s4 = sld [smem:[#allocation0]]
  $region34: #{attention_model_bak_forward.1} parent=0
    _
  %s6 = ssub.s32 1, %s4
  %s7 = scalar_select 0, %s6, %s4
  $region1: #{attention_model_bak_forward.1} parent=0
    #allocation2 [shape = 'u8[81920]{0}', space=vmem, size = 0x14000, scoped, tag = 'input window, operand 0, single buffered']
    #allocation3 [shape = 's32[1]{0}', space=sflag, size = 0x4, scoped, tag = 'scoped memory for attention_model_bak_forward.1']
    #allocation4 [shape = 's32[1]{0}', space=sflag, size = 0x4, scoped, tag = 'scoped memory for attention_model_bak_forward.1']
    #allocation5 [shape = 'u8[1310720]{0}', space=vmem, size = 0x140000, scoped, tag = 'input window, operand 1, single buffered']
    #allocation6 [shape = 's32[1]{0}', space=sflag, size = 0x4, scoped, tag = 'scoped memory for attention_model_bak_forward.1']
    #allocation7 [shape = 'u8[1024]{0}', space=vmem, size = 0x400, scoped, tag = 'input window, operand 2, single buffered']
    #allocation8 [shape = 'u8[16384]{0}', space=vmem, size = 0x4000, scoped, tag = 'output window, operand 0, single buffered']
    %8 = vsyncpa [#allocation3], 0
    %9 = vsyncpa [#allocation6], 0
    %10 = vsyncpa [#allocation4], 0
    // Predicated region
    $region2: #{attention_model_bak_forward.1} parent=1 // pred_check
      _
    $region3: #{attention_model_bak_forward.1} parent=1 // pred_check_branch
      %12 = sbr.rel (0) target = $region5
    $region4: #{attention_model_bak_forward.1} parent=1 // pred_region
      %s14 = ssub.s32 2560, 2560
      %15 = vsyncadd [#allocation3], %s14
      %s16 = sshll.u32 [#allocation2], 4
      %s17 = int_to_ptr.vmem [resolvable:$true] %s16
      %22 = dma.hbm_to_vmem [thread:$0]  %s0, 2560, %s17, [#allocation3], 1280, 1280, 80
    $region5: #{attention_model_bak_forward.1} parent=1 // pred_fallthru
      _
    // Predicated region
    $region6: #{attention_model_bak_forward.1} parent=1 // pred_check
      _
    $region7: #{attention_model_bak_forward.1} parent=1 // pred_check_branch
      %24 = sbr.rel (0) target = $region9
    $region8: #{attention_model_bak_forward.1} parent=1 // pred_region
      %s26 = ssub.s32 40960, 40960
      %27 = vsyncadd [#allocation6], %s26
      %s28 = sshll.u32 [#allocation5], 4
      %s29 = int_to_ptr.vmem [resolvable:$true] %s28
      %34 = dma.hbm_to_vmem [thread:$0]  %s1, 40960, %s29, [#allocation6], 256, 256, 16
    $region9: #{attention_model_bak_forward.1} parent=1 // pred_fallthru
      _
    // Predicated region
    $region10: #{attention_model_bak_forward.1} parent=1 // pred_check
      _
    $region11: #{attention_model_bak_forward.1} parent=1 // pred_check_branch
      %36 = sbr.rel (0) target = $region13
    $region12: #{attention_model_bak_forward.1} parent=1 // pred_region
      %s38 = ssub.s32 32, 32
      %39 = vsyncadd [#allocation6], %s38
      %s41 = sshll.u32 [#allocation7], 4
      %s42 = int_to_ptr.vmem [resolvable:$true] %s41
      %44 = dma.hbm_to_vmem [thread:$0]  %s2, 32, %s42, [#allocation6]
    $region13: #{attention_model_bak_forward.1} parent=1 // pred_fallthru
      _
    // Predicated region
    $region14: #{attention_model_bak_forward.1} parent=1 // pred_check
      _
    $region15: #{attention_model_bak_forward.1} parent=1 // pred_check_branch
      %46 = sbr.rel (0) target = $region17
    $region16: #{attention_model_bak_forward.1} parent=1 // pred_region
      %47 = dma.done [#allocation3], 2560
    $region17: #{attention_model_bak_forward.1} parent=1 // pred_fallthru
      _
    // Predicated region
    $region18: #{attention_model_bak_forward.1} parent=1 // pred_check
      _
    $region19: #{attention_model_bak_forward.1} parent=1 // pred_check_branch
      %49 = sbr.rel (0) target = $region21
    $region20: #{attention_model_bak_forward.1} parent=1 // pred_region
      %50 = dma.done [#allocation6], 40960
    $region21: #{attention_model_bak_forward.1} parent=1 // pred_fallthru
      _
    // Predicated region
    $region22: #{attention_model_bak_forward.1} parent=1 // pred_check
      _
    $region23: #{attention_model_bak_forward.1} parent=1 // pred_check_branch
      %52 = sbr.rel (0) target = $region25
    $region24: #{attention_model_bak_forward.1} parent=1 // pred_region
      %53 = dma.done [#allocation6], 32
    $region25: #{attention_model_bak_forward.1} parent=1 // pred_fallthru
      _
    %v54 = vld [vmem:[#allocation2] sm:$0xff]
    %v55 = vld [vmem:[#allocation2 + $0x8] sm:$0xff]
    %v56 = vld [vmem:[#allocation2 + $0x10] sm:$0xff]
    %v57 = vld [vmem:[#allocation2 + $0x18] sm:$0xff]
    %v58 = vld [vmem:[#allocation2 + $0x20] sm:$0xff]
    %v59 = vld [vmem:[#allocation2 + $0x28] sm:$0xff]
    %v60 = vld [vmem:[#allocation2 + $0x30] sm:$0xff]
    %v61 = vld [vmem:[#allocation2 + $0x38] sm:$0xff]
    %v62 = vld [vmem:[#allocation2 + $0x40] sm:$0xff]
    %v63 = vld [vmem:[#allocation2 + $0x48] sm:$0xff]
    %v64 = vld [vmem:[#allocation2 + $0x50] sm:$0xff]
    %v65 = vld [vmem:[#allocation2 + $0x58] sm:$0xff]
    %v66 = vld [vmem:[#allocation2 + $0x60] sm:$0xff]
    %v67 = vld [vmem:[#allocation2 + $0x68] sm:$0xff]
    %v68 = vld [vmem:[#allocation2 + $0x70] sm:$0xff]
    %v69 = vld [vmem:[#allocation2 + $0x78] sm:$0xff]
    %v70 = vld [vmem:[#allocation2 + $0x80] sm:$0xff]
    %v71 = vld [vmem:[#allocation2 + $0x88] sm:$0xff]
    %v72 = vld [vmem:[#allocation2 + $0x90] sm:$0xff]
    %v73 = vld [vmem:[#allocation2 + $0x98] sm:$0xff]
    %v74 = vld [vmem:[#allocation5] sm:$0xff]
    %v75 = vld [vmem:[#allocation5 + $0x8] sm:$0xff]
    %v76 = vld [vmem:[#allocation5 + $0x10] sm:$0xff]
    %v77 = vld [vmem:[#allocation5 + $0x18] sm:$0xff]
    %v78 = vld [vmem:[#allocation5 + $0x20] sm:$0xff]
    %v79 = vld [vmem:[#allocation5 + $0x28] sm:$0xff]
    %v80 = vld [vmem:[#allocation5 + $0x30] sm:$0xff]
    %v81 = vld [vmem:[#allocation5 + $0x38] sm:$0xff]
    %v82 = vld [vmem:[#allocation5 + $0x40] sm:$0xff]
    %v83 = vld [vmem:[#allocation5 + $0x48] sm:$0xff]
    %v84 = vld [vmem:[#allocation5 + $0x50] sm:$0xff]
    %v85 = vld [vmem:[#allocation5 + $0x58] sm:$0xff]
    %v86 = vld [vmem:[#allocation5 + $0x60] sm:$0xff]
    %v87 = vld [vmem:[#allocation5 + $0x68] sm:$0xff]
    %v88 = vld [vmem:[#allocation5 + $0x70] sm:$0xff]
    %v89 = vld [vmem:[#allocation5 + $0x78] sm:$0xff]
    %v90 = vld [vmem:[#allocation5 + $0x80] sm:$0xff]
    %v91 = vld [vmem:[#allocation5 + $0x88] sm:$0xff]
    %v92 = vld [vmem:[#allocation5 + $0x90] sm:$0xff]
    %v93 = vld [vmem:[#allocation5 + $0x98] sm:$0xff]
    %v94 = vld [vmem:[#allocation5 + $0xa0] sm:$0xff]
    %v95 = vld [vmem:[#allocation5 + $0xa8] sm:$0xff]
    %v96 = vld [vmem:[#allocation5 + $0xb0] sm:$0xff]
    %v97 = vld [vmem:[#allocation5 + $0xb8] sm:$0xff]
    %v98 = vld [vmem:[#allocation5 + $0xc0] sm:$0xff]
    %v99 = vld [vmem:[#allocation5 + $0xc8] sm:$0xff]
    %v100 = vld [vmem:[#allocation5 + $0xd0] sm:$0xff]
    %v101 = vld [vmem:[#allocation5 + $0xd8] sm:$0xff]
    %v102 = vld [vmem:[#allocation5 + $0xe0] sm:$0xff]
    %v103 = vld [vmem:[#allocation5 + $0xe8] sm:$0xff]
    %v104 = vld [vmem:[#allocation5 + $0xf0] sm:$0xff]
    %v105 = vld [vmem:[#allocation5 + $0xf8] sm:$0xff]
    %v106 = vld [vmem:[#allocation5 + $0x100] sm:$0xff]
    %v107 = vld [vmem:[#allocation5 + $0x108] sm:$0xff]
    %v108 = vld [vmem:[#allocation5 + $0x110] sm:$0xff]
    %v109 = vld [vmem:[#allocation5 + $0x118] sm:$0xff]
    %v110 = vld [vmem:[#allocation5 + $0x120] sm:$0xff]
    %v111 = vld [vmem:[#allocation5 + $0x128] sm:$0xff]
    %v112 = vld [vmem:[#allocation5 + $0x130] sm:$0xff]
    %v113 = vld [vmem:[#allocation5 + $0x138] sm:$0xff]
    %v114 = vld [vmem:[#allocation5 + $0x140] sm:$0xff]
    %v115 = vld [vmem:[#allocation5 + $0x148] sm:$0xff]
    %v116 = vld [vmem:[#allocation5 + $0x150] sm:$0xff]
    %v117 = vld [vmem:[#allocation5 + $0x158] sm:$0xff]
    %v118 = vld [vmem:[#allocation5 + $0x160] sm:$0xff]
    %v119 = vld [vmem:[#allocation5 + $0x168] sm:$0xff]
    %v120 = vld [vmem:[#allocation5 + $0x170] sm:$0xff]
    %v121 = vld [vmem:[#allocation5 + $0x178] sm:$0xff]
    %v122 = vld [vmem:[#allocation5 + $0x180] sm:$0xff]
    %v123 = vld [vmem:[#allocation5 + $0x188] sm:$0xff]
    %v124 = vld [vmem:[#allocation5 + $0x190] sm:$0xff]
    %v125 = vld [vmem:[#allocation5 + $0x198] sm:$0xff]
    %v126 = vld [vmem:[#allocation5 + $0x1a0] sm:$0xff]
    %v127 = vld [vmem:[#allocation5 + $0x1a8] sm:$0xff]
    %v128 = vld [vmem:[#allocation5 + $0x1b0] sm:$0xff]
    %v129 = vld [vmem:[#allocation5 + $0x1b8] sm:$0xff]
    %v130 = vld [vmem:[#allocation5 + $0x1c0] sm:$0xff]
    %v131 = vld [vmem:[#allocation5 + $0x1c8] sm:$0xff]
    %v132 = vld [vmem:[#allocation5 + $0x1d0] sm:$0xff]
    %v133 = vld [vmem:[#allocation5 + $0x1d8] sm:$0xff]
    %v134 = vld [vmem:[#allocation5 + $0x1e0] sm:$0xff]
    %v135 = vld [vmem:[#allocation5 + $0x1e8] sm:$0xff]
    %v136 = vld [vmem:[#allocation5 + $0x1f0] sm:$0xff]
    %v137 = vld [vmem:[#allocation5 + $0x1f8] sm:$0xff]
    %v138 = vld [vmem:[#allocation5 + $0x200] sm:$0xff]
    %v139 = vld [vmem:[#allocation5 + $0x208] sm:$0xff]
    %v140 = vld [vmem:[#allocation5 + $0x210] sm:$0xff]
    %v141 = vld [vmem:[#allocation5 + $0x218] sm:$0xff]
    %v142 = vld [vmem:[#allocation5 + $0x220] sm:$0xff]
    %v143 = vld [vmem:[#allocation5 + $0x228] sm:$0xff]
    %v144 = vld [vmem:[#allocation5 + $0x230] sm:$0xff]
    %v145 = vld [vmem:[#allocation5 + $0x238] sm:$0xff]
    %v146 = vld [vmem:[#allocation5 + $0x240] sm:$0xff]
    %v147 = vld [vmem:[#allocation5 + $0x248] sm:$0xff]
    %v148 = vld [vmem:[#allocation5 + $0x250] sm:$0xff]
    %v149 = vld [vmem:[#allocation5 + $0x258] sm:$0xff]
    %v150 = vld [vmem:[#allocation5 + $0x260] sm:$0xff]
    %v151 = vld [vmem:[#allocation5 + $0x268] sm:$0xff]
    %v152 = vld [vmem:[#allocation5 + $0x270] sm:$0xff]
    %v153 = vld [vmem:[#allocation5 + $0x278] sm:$0xff]
    %v154 = vld [vmem:[#allocation5 + $0x280] sm:$0xff]
    %v155 = vld [vmem:[#allocation5 + $0x288] sm:$0xff]
    %v156 = vld [vmem:[#allocation5 + $0x290] sm:$0xff]
    %v157 = vld [vmem:[#allocation5 + $0x298] sm:$0xff]
    %v158 = vld [vmem:[#allocation5 + $0x2a0] sm:$0xff]
    %v159 = vld [vmem:[#allocation5 + $0x2a8] sm:$0xff]
    %v160 = vld [vmem:[#allocation5 + $0x2b0] sm:$0xff]
    %v161 = vld [vmem:[#allocation5 + $0x2b8] sm:$0xff]
    %v162 = vld [vmem:[#allocation5 + $0x2c0] sm:$0xff]
    %v163 = vld [vmem:[#allocation5 + $0x2c8] sm:$0xff]
    %v164 = vld [vmem:[#allocation5 + $0x2d0] sm:$0xff]
    %v165 = vld [vmem:[#allocation5 + $0x2d8] sm:$0xff]
    %v166 = vld [vmem:[#allocation5 + $0x2e0] sm:$0xff]
    %v167 = vld [vmem:[#allocation5 + $0x2e8] sm:$0xff]
    %v168 = vld [vmem:[#allocation5 + $0x2f0] sm:$0xff]
    %v169 = vld [vmem:[#allocation5 + $0x2f8] sm:$0xff]
    %v170 = vld [vmem:[#allocation5 + $0x300] sm:$0xff]
    %v171 = vld [vmem:[#allocation5 + $0x308] sm:$0xff]
    %v172 = vld [vmem:[#allocation5 + $0x310] sm:$0xff]
    %v173 = vld [vmem:[#allocation5 + $0x318] sm:$0xff]
    %v174 = vld [vmem:[#allocation5 + $0x320] sm:$0xff]
    %v175 = vld [vmem:[#allocation5 + $0x328] sm:$0xff]
    %v176 = vld [vmem:[#allocation5 + $0x330] sm:$0xff]
    %v177 = vld [vmem:[#allocation5 + $0x338] sm:$0xff]
    %v178 = vld [vmem:[#allocation5 + $0x340] sm:$0xff]
    %v179 = vld [vmem:[#allocation5 + $0x348] sm:$0xff]
    %v180 = vld [vmem:[#allocation5 + $0x350] sm:$0xff]
    %v181 = vld [vmem:[#allocation5 + $0x358] sm:$0xff]
    %v182 = vld [vmem:[#allocation5 + $0x360] sm:$0xff]
    %v183 = vld [vmem:[#allocation5 + $0x368] sm:$0xff]
    %v184 = vld [vmem:[#allocation5 + $0x370] sm:$0xff]
    %v185 = vld [vmem:[#allocation5 + $0x378] sm:$0xff]
    %v186 = vld [vmem:[#allocation5 + $0x380] sm:$0xff]
    %v187 = vld [vmem:[#allocation5 + $0x388] sm:$0xff]
    %v188 = vld [vmem:[#allocation5 + $0x390] sm:$0xff]
    %v189 = vld [vmem:[#allocation5 + $0x398] sm:$0xff]
    %v190 = vld [vmem:[#allocation5 + $0x3a0] sm:$0xff]
    %v191 = vld [vmem:[#allocation5 + $0x3a8] sm:$0xff]
    %v192 = vld [vmem:[#allocation5 + $0x3b0] sm:$0xff]
    %v193 = vld [vmem:[#allocation5 + $0x3b8] sm:$0xff]
    %v194 = vld [vmem:[#allocation5 + $0x3c0] sm:$0xff]
    %v195 = vld [vmem:[#allocation5 + $0x3c8] sm:$0xff]
    %v196 = vld [vmem:[#allocation5 + $0x3d0] sm:$0xff]
    %v197 = vld [vmem:[#allocation5 + $0x3d8] sm:$0xff]
    %v198 = vld [vmem:[#allocation5 + $0x3e0] sm:$0xff]
    %v199 = vld [vmem:[#allocation5 + $0x3e8] sm:$0xff]
    %v200 = vld [vmem:[#allocation5 + $0x3f0] sm:$0xff]
    %v201 = vld [vmem:[#allocation5 + $0x3f8] sm:$0xff]
    %v202 = vld [vmem:[#allocation5 + $0x400] sm:$0xff]
    %v203 = vld [vmem:[#allocation5 + $0x408] sm:$0xff]
    %v204 = vld [vmem:[#allocation5 + $0x410] sm:$0xff]
    %v205 = vld [vmem:[#allocation5 + $0x418] sm:$0xff]
    %v206 = vld [vmem:[#allocation5 + $0x420] sm:$0xff]
    %v207 = vld [vmem:[#allocation5 + $0x428] sm:$0xff]
    %v208 = vld [vmem:[#allocation5 + $0x430] sm:$0xff]
    %v209 = vld [vmem:[#allocation5 + $0x438] sm:$0xff]
    %v210 = vld [vmem:[#allocation5 + $0x440] sm:$0xff]
    %v211 = vld [vmem:[#allocation5 + $0x448] sm:$0xff]
    %v212 = vld [vmem:[#allocation5 + $0x450] sm:$0xff]
    %v213 = vld [vmem:[#allocation5 + $0x458] sm:$0xff]
    %v214 = vld [vmem:[#allocation5 + $0x460] sm:$0xff]
    %v215 = vld [vmem:[#allocation5 + $0x468] sm:$0xff]
    %v216 = vld [vmem:[#allocation5 + $0x470] sm:$0xff]
    %v217 = vld [vmem:[#allocation5 + $0x478] sm:$0xff]
    %v218 = vld [vmem:[#allocation5 + $0x480] sm:$0xff]
    %v219 = vld [vmem:[#allocation5 + $0x488] sm:$0xff]
    %v220 = vld [vmem:[#allocation5 + $0x490] sm:$0xff]
    %v221 = vld [vmem:[#allocation5 + $0x498] sm:$0xff]
    %v222 = vld [vmem:[#allocation5 + $0x4a0] sm:$0xff]
    %v223 = vld [vmem:[#allocation5 + $0x4a8] sm:$0xff]
    %v224 = vld [vmem:[#allocation5 + $0x4b0] sm:$0xff]
    %v225 = vld [vmem:[#allocation5 + $0x4b8] sm:$0xff]
    %v226 = vld [vmem:[#allocation5 + $0x4c0] sm:$0xff]
    %v227 = vld [vmem:[#allocation5 + $0x4c8] sm:$0xff]
    %v228 = vld [vmem:[#allocation5 + $0x4d0] sm:$0xff]
    %v229 = vld [vmem:[#allocation5 + $0x4d8] sm:$0xff]
    %v230 = vld [vmem:[#allocation5 + $0x4e0] sm:$0xff]
    %v231 = vld [vmem:[#allocation5 + $0x4e8] sm:$0xff]
    %v232 = vld [vmem:[#allocation5 + $0x4f0] sm:$0xff]
    %v233 = vld [vmem:[#allocation5 + $0x4f8] sm:$0xff]
    %v234 = vld [vmem:[#allocation5 + $0x500] sm:$0xff]
    %v235 = vld [vmem:[#allocation5 + $0x508] sm:$0xff]
    %v236 = vld [vmem:[#allocation5 + $0x510] sm:$0xff]
    %v237 = vld [vmem:[#allocation5 + $0x518] sm:$0xff]
    %v238 = vld [vmem:[#allocation5 + $0x520] sm:$0xff]
    %v239 = vld [vmem:[#allocation5 + $0x528] sm:$0xff]
    %v240 = vld [vmem:[#allocation5 + $0x530] sm:$0xff]
    %v241 = vld [vmem:[#allocation5 + $0x538] sm:$0xff]
    %v242 = vld [vmem:[#allocation5 + $0x540] sm:$0xff]
    %v243 = vld [vmem:[#allocation5 + $0x548] sm:$0xff]
    %v244 = vld [vmem:[#allocation5 + $0x550] sm:$0xff]
    %v245 = vld [vmem:[#allocation5 + $0x558] sm:$0xff]
    %v246 = vld [vmem:[#allocation5 + $0x560] sm:$0xff]
    %v247 = vld [vmem:[#allocation5 + $0x568] sm:$0xff]
    %v248 = vld [vmem:[#allocation5 + $0x570] sm:$0xff]
    %v249 = vld [vmem:[#allocation5 + $0x578] sm:$0xff]
    %v250 = vld [vmem:[#allocation5 + $0x580] sm:$0xff]
    %v251 = vld [vmem:[#allocation5 + $0x588] sm:$0xff]
    %v252 = vld [vmem:[#allocation5 + $0x590] sm:$0xff]
    %v253 = vld [vmem:[#allocation5 + $0x598] sm:$0xff]
    %v254 = vld [vmem:[#allocation5 + $0x5a0] sm:$0xff]
    %v255 = vld [vmem:[#allocation5 + $0x5a8] sm:$0xff]
    %v256 = vld [vmem:[#allocation5 + $0x5b0] sm:$0xff]
    %v257 = vld [vmem:[#allocation5 + $0x5b8] sm:$0xff]
    %v258 = vld [vmem:[#allocation5 + $0x5c0] sm:$0xff]
    %v259 = vld [vmem:[#allocation5 + $0x5c8] sm:$0xff]
    %v260 = vld [vmem:[#allocation5 + $0x5d0] sm:$0xff]
    %v261 = vld [vmem:[#allocation5 + $0x5d8] sm:$0xff]
    %v262 = vld [vmem:[#allocation5 + $0x5e0] sm:$0xff]
    %v263 = vld [vmem:[#allocation5 + $0x5e8] sm:$0xff]
    %v264 = vld [vmem:[#allocation5 + $0x5f0] sm:$0xff]
    %v265 = vld [vmem:[#allocation5 + $0x5f8] sm:$0xff]
    %v266 = vld [vmem:[#allocation5 + $0x600] sm:$0xff]
    %v267 = vld [vmem:[#allocation5 + $0x608] sm:$0xff]
    %v268 = vld [vmem:[#allocation5 + $0x610] sm:$0xff]
    %v269 = vld [vmem:[#allocation5 + $0x618] sm:$0xff]
    %v270 = vld [vmem:[#allocation5 + $0x620] sm:$0xff]
    %v271 = vld [vmem:[#allocation5 + $0x628] sm:$0xff]
    %v272 = vld [vmem:[#allocation5 + $0x630] sm:$0xff]
    %v273 = vld [vmem:[#allocation5 + $0x638] sm:$0xff]
    %v274 = vld [vmem:[#allocation5 + $0x640] sm:$0xff]
    %v275 = vld [vmem:[#allocation5 + $0x648] sm:$0xff]
    %v276 = vld [vmem:[#allocation5 + $0x650] sm:$0xff]
    %v277 = vld [vmem:[#allocation5 + $0x658] sm:$0xff]
    %v278 = vld [vmem:[#allocation5 + $0x660] sm:$0xff]
    %v279 = vld [vmem:[#allocation5 + $0x668] sm:$0xff]
    %v280 = vld [vmem:[#allocation5 + $0x670] sm:$0xff]
    %v281 = vld [vmem:[#allocation5 + $0x678] sm:$0xff]
    %v282 = vld [vmem:[#allocation5 + $0x680] sm:$0xff]
    %v283 = vld [vmem:[#allocation5 + $0x688] sm:$0xff]
    %v284 = vld [vmem:[#allocation5 + $0x690] sm:$0xff]
    %v285 = vld [vmem:[#allocation5 + $0x698] sm:$0xff]
    %v286 = vld [vmem:[#allocation5 + $0x6a0] sm:$0xff]
    %v287 = vld [vmem:[#allocation5 + $0x6a8] sm:$0xff]
    %v288 = vld [vmem:[#allocation5 + $0x6b0] sm:$0xff]
    %v289 = vld [vmem:[#allocation5 + $0x6b8] sm:$0xff]
    %v290 = vld [vmem:[#allocation5 + $0x6c0] sm:$0xff]
    %v291 = vld [vmem:[#allocation5 + $0x6c8] sm:$0xff]
    %v292 = vld [vmem:[#allocation5 + $0x6d0] sm:$0xff]
    %v293 = vld [vmem:[#allocation5 + $0x6d8] sm:$0xff]
    %v294 = vld [vmem:[#allocation5 + $0x6e0] sm:$0xff]
    %v295 = vld [vmem:[#allocation5 + $0x6e8] sm:$0xff]
    %v296 = vld [vmem:[#allocation5 + $0x6f0] sm:$0xff]
    %v297 = vld [vmem:[#allocation5 + $0x6f8] sm:$0xff]
    %v298 = vld [vmem:[#allocation5 + $0x700] sm:$0xff]
    %v299 = vld [vmem:[#allocation5 + $0x708] sm:$0xff]
    %v300 = vld [vmem:[#allocation5 + $0x710] sm:$0xff]
    %v301 = vld [vmem:[#allocation5 + $0x718] sm:$0xff]
    %v302 = vld [vmem:[#allocation5 + $0x720] sm:$0xff]
    %v303 = vld [vmem:[#allocation5 + $0x728] sm:$0xff]
    %v304 = vld [vmem:[#allocation5 + $0x730] sm:$0xff]
    %v305 = vld [vmem:[#allocation5 + $0x738] sm:$0xff]
    %v306 = vld [vmem:[#allocation5 + $0x740] sm:$0xff]
    %v307 = vld [vmem:[#allocation5 + $0x748] sm:$0xff]
    %v308 = vld [vmem:[#allocation5 + $0x750] sm:$0xff]
    %v309 = vld [vmem:[#allocation5 + $0x758] sm:$0xff]
    %v310 = vld [vmem:[#allocation5 + $0x760] sm:$0xff]
    %v311 = vld [vmem:[#allocation5 + $0x768] sm:$0xff]
    %v312 = vld [vmem:[#allocation5 + $0x770] sm:$0xff]
    %v313 = vld [vmem:[#allocation5 + $0x778] sm:$0xff]
    %v314 = vld [vmem:[#allocation5 + $0x780] sm:$0xff]
    %v315 = vld [vmem:[#allocation5 + $0x788] sm:$0xff]
    %v316 = vld [vmem:[#allocation5 + $0x790] sm:$0xff]
    %v317 = vld [vmem:[#allocation5 + $0x798] sm:$0xff]
    %v318 = vld [vmem:[#allocation5 + $0x7a0] sm:$0xff]
    %v319 = vld [vmem:[#allocation5 + $0x7a8] sm:$0xff]
    %v320 = vld [vmem:[#allocation5 + $0x7b0] sm:$0xff]
    %v321 = vld [vmem:[#allocation5 + $0x7b8] sm:$0xff]
    %v322 = vld [vmem:[#allocation5 + $0x7c0] sm:$0xff]
    %v323 = vld [vmem:[#allocation5 + $0x7c8] sm:$0xff]
    %v324 = vld [vmem:[#allocation5 + $0x7d0] sm:$0xff]
    %v325 = vld [vmem:[#allocation5 + $0x7d8] sm:$0xff]
    %v326 = vld [vmem:[#allocation5 + $0x7e0] sm:$0xff]
    %v327 = vld [vmem:[#allocation5 + $0x7e8] sm:$0xff]
    %v328 = vld [vmem:[#allocation5 + $0x7f0] sm:$0xff]
    %v329 = vld [vmem:[#allocation5 + $0x7f8] sm:$0xff]
    %v330 = vld [vmem:[#allocation5 + $0x800] sm:$0xff]
    %v331 = vld [vmem:[#allocation5 + $0x808] sm:$0xff]
    %v332 = vld [vmem:[#allocation5 + $0x810] sm:$0xff]
    %v333 = vld [vmem:[#allocation5 + $0x818] sm:$0xff]
    %v334 = vld [vmem:[#allocation5 + $0x820] sm:$0xff]
    %v335 = vld [vmem:[#allocation5 + $0x828] sm:$0xff]
    %v336 = vld [vmem:[#allocation5 + $0x830] sm:$0xff]
    %v337 = vld [vmem:[#allocation5 + $0x838] sm:$0xff]
    %v338 = vld [vmem:[#allocation5 + $0x840] sm:$0xff]
    %v339 = vld [vmem:[#allocation5 + $0x848] sm:$0xff]
    %v340 = vld [vmem:[#allocation5 + $0x850] sm:$0xff]
    %v341 = vld [vmem:[#allocation5 + $0x858] sm:$0xff]
    %v342 = vld [vmem:[#allocation5 + $0x860] sm:$0xff]
    %v343 = vld [vmem:[#allocation5 + $0x868] sm:$0xff]
    %v344 = vld [vmem:[#allocation5 + $0x870] sm:$0xff]
    %v345 = vld [vmem:[#allocation5 + $0x878] sm:$0xff]
    %v346 = vld [vmem:[#allocation5 + $0x880] sm:$0xff]
    %v347 = vld [vmem:[#allocation5 + $0x888] sm:$0xff]
    %v348 = vld [vmem:[#allocation5 + $0x890] sm:$0xff]
    %v349 = vld [vmem:[#allocation5 + $0x898] sm:$0xff]
    %v350 = vld [vmem:[#allocation5 + $0x8a0] sm:$0xff]
    %v351 = vld [vmem:[#allocation5 + $0x8a8] sm:$0xff]
    %v352 = vld [vmem:[#allocation5 + $0x8b0] sm:$0xff]
    %v353 = vld [vmem:[#allocation5 + $0x8b8] sm:$0xff]
    %v354 = vld [vmem:[#allocation5 + $0x8c0] sm:$0xff]
    %v355 = vld [vmem:[#allocation5 + $0x8c8] sm:$0xff]
    %v356 = vld [vmem:[#allocation5 + $0x8d0] sm:$0xff]
    %v357 = vld [vmem:[#allocation5 + $0x8d8] sm:$0xff]
    %v358 = vld [vmem:[#allocation5 + $0x8e0] sm:$0xff]
    %v359 = vld [vmem:[#allocation5 + $0x8e8] sm:$0xff]
    %v360 = vld [vmem:[#allocation5 + $0x8f0] sm:$0xff]
    %v361 = vld [vmem:[#allocation5 + $0x8f8] sm:$0xff]
    %v362 = vld [vmem:[#allocation5 + $0x900] sm:$0xff]
    %v363 = vld [vmem:[#allocation5 + $0x908] sm:$0xff]
    %v364 = vld [vmem:[#allocation5 + $0x910] sm:$0xff]
    %v365 = vld [vmem:[#allocation5 + $0x918] sm:$0xff]
    %v366 = vld [vmem:[#allocation5 + $0x920] sm:$0xff]
    %v367 = vld [vmem:[#allocation5 + $0x928] sm:$0xff]
    %v368 = vld [vmem:[#allocation5 + $0x930] sm:$0xff]
    %v369 = vld [vmem:[#allocation5 + $0x938] sm:$0xff]
    %v370 = vld [vmem:[#allocation5 + $0x940] sm:$0xff]
    %v371 = vld [vmem:[#allocation5 + $0x948] sm:$0xff]
    %v372 = vld [vmem:[#allocation5 + $0x950] sm:$0xff]
    %v373 = vld [vmem:[#allocation5 + $0x958] sm:$0xff]
    %v374 = vld [vmem:[#allocation5 + $0x960] sm:$0xff]
    %v375 = vld [vmem:[#allocation5 + $0x968] sm:$0xff]
    %v376 = vld [vmem:[#allocation5 + $0x970] sm:$0xff]
    %v377 = vld [vmem:[#allocation5 + $0x978] sm:$0xff]
    %v378 = vld [vmem:[#allocation5 + $0x980] sm:$0xff]
    %v379 = vld [vmem:[#allocation5 + $0x988] sm:$0xff]
    %v380 = vld [vmem:[#allocation5 + $0x990] sm:$0xff]
    %v381 = vld [vmem:[#allocation5 + $0x998] sm:$0xff]
    %v382 = vld [vmem:[#allocation5 + $0x9a0] sm:$0xff]
    %v383 = vld [vmem:[#allocation5 + $0x9a8] sm:$0xff]
    %v384 = vld [vmem:[#allocation5 + $0x9b0] sm:$0xff]
    %v385 = vld [vmem:[#allocation5 + $0x9b8] sm:$0xff]
    %v386 = vld [vmem:[#allocation5 + $0x9c0] sm:$0xff]
    %v387 = vld [vmem:[#allocation5 + $0x9c8] sm:$0xff]
    %v388 = vld [vmem:[#allocation5 + $0x9d0] sm:$0xff]
    %v389 = vld [vmem:[#allocation5 + $0x9d8] sm:$0xff]
    %v390 = vld [vmem:[#allocation5 + $0x9e0] sm:$0xff]
    %v391 = vld [vmem:[#allocation5 + $0x9e8] sm:$0xff]
    %v392 = vld [vmem:[#allocation5 + $0x9f0] sm:$0xff]
    %v393 = vld [vmem:[#allocation5 + $0x9f8] sm:$0xff]
    %v394 = vld [vmem:[#allocation7] sm:$0x3]
    %v396 = vlaneseq
    %v397 = vshrl.u32 %v396, 7
    %v398 = vsub.s32 0, %v397
    %v399 = vrot.slane %v394, %v398
    %v400 = vlaneseq
    %v401 = vshrl.u32 %v400, 7
    %v402 = vsub.s32 1, %v401
    %v403 = vrot.slane %v394, %v402
    %406 = vmatprep.subr.mxu0 %v75
    %407 = vmatpush1.msra.mxu0 %v74
    %408 = vmatprep.subr.mxu0 %v77
    %409 = vmatpush1.msra.mxu0 %v76
    %410 = vmatprep.subr.mxu0 %v79
    %411 = vmatpush1.msra.mxu0 %v78
    %412 = vmatprep.subr.mxu0 %v81
    %413 = vmatpush1.msra.mxu0 %v80
    %414 = vmatprep.subr.mxu0 %v83
    %415 = vmatpush1.msra.mxu0 %v82
    %416 = vmatprep.subr.mxu0 %v85
    %417 = vmatpush1.msra.mxu0 %v84
    %418 = vmatprep.subr.mxu0 %v87
    %419 = vmatpush1.msra.mxu0 %v86
    %420 = vmatprep.subr.mxu0 %v89
    %421 = vmatpush1.msra.mxu0 %v88
    %422 = vmatprep.subr.mxu0 %v91
    %423 = vmatpush1.msra.mxu0 %v90
    %424 = vmatprep.subr.mxu0 %v93
    %425 = vmatpush1.msra.mxu0 %v92
    %426 = vmatprep.subr.mxu0 %v95
    %427 = vmatpush1.msra.mxu0 %v94
    %428 = vmatprep.subr.mxu0 %v97
    %429 = vmatpush1.msra.mxu0 %v96
    %430 = vmatprep.subr.mxu0 %v99
    %431 = vmatpush1.msra.mxu0 %v98
    %432 = vmatprep.subr.mxu0 %v101
    %433 = vmatpush1.msra.mxu0 %v100
    %434 = vmatprep.subr.mxu0 %v103
    %435 = vmatpush1.msra.mxu0 %v102
    %436 = vmatprep.subr.mxu0 %v105
    %437 = vmatpush1.msra.mxu0 %v104
    %438 = vmatprep.subr.mxu0 %v107
    %439 = vmatpush1.msra.mxu0 %v106
    %440 = vmatprep.subr.mxu0 %v109
    %441 = vmatpush1.msra.mxu0 %v108
    %442 = vmatprep.subr.mxu0 %v111
    %443 = vmatpush1.msra.mxu0 %v110
    %444 = vmatprep.subr.mxu0 %v113
    %445 = vmatpush1.msra.mxu0 %v112
    %446 = vmatprep.subr.mxu0 %v115
    %447 = vmatpush1.msra.mxu0 %v114
    %448 = vmatprep.subr.mxu0 %v117
    %449 = vmatpush1.msra.mxu0 %v116
    %450 = vmatprep.subr.mxu0 %v119
    %451 = vmatpush1.msra.mxu0 %v118
    %452 = vmatprep.subr.mxu0 %v121
    %453 = vmatpush1.msra.mxu0 %v120
    %454 = vmatprep.subr.mxu0 %v123
    %455 = vmatpush1.msra.mxu0 %v122
    %456 = vmatprep.subr.mxu0 %v125
    %457 = vmatpush1.msra.mxu0 %v124
    %458 = vmatprep.subr.mxu0 %v127
    %459 = vmatpush1.msra.mxu0 %v126
    %460 = vmatprep.subr.mxu0 %v129
    %461 = vmatpush1.msra.mxu0 %v128
    %462 = vmatprep.subr.mxu0 %v131
    %463 = vmatpush1.msra.mxu0 %v130
    %464 = vmatprep.subr.mxu0 %v133
    %465 = vmatpush1.msra.mxu0 %v132
    %466 = vmatprep.subr.mxu0 %v135
    %467 = vmatpush1.msra.mxu0 %v134
    %468 = vmatprep.subr.mxu0 %v137
    %469 = vmatpush1.msra.mxu0 %v136
    %470 = vmatprep.mubr.f32.mxu0 %v55
    %471 = vmatmul.mubr.f32.gmra.mrb[0].mxu0 %v54
    %v472 = vpop.f32.mrb[0].mxu0
    %v473 = vadd.f32 %v399, %v472
    %v474 = vpop.f32.mrb[0].mxu0
    %v475 = vadd.f32 %v403, %v474
    %476 = vmatprep.mubr.f32.mxu0 %v65
    %477 = vmatmul.mubr.f32.gmra.mrb[0].mxu0 %v64
    %v478 = vpop.f32.mrb[0].mxu0
    %v479 = vadd.f32 %v399, %v478
    %v480 = vpop.f32.mrb[0].mxu0
    %v481 = vadd.f32 %v403, %v480
    %482 = vdwg.mxu0
    %483 = vmatprep.subr.mxu0 %v139
    %484 = vmatpush1.msra.mxu0 %v138
    %485 = vmatprep.subr.mxu0 %v141
    %486 = vmatpush1.msra.mxu0 %v140
    %487 = vmatprep.subr.mxu0 %v143
    %488 = vmatpush1.msra.mxu0 %v142
    %489 = vmatprep.subr.mxu0 %v145
    %490 = vmatpush1.msra.mxu0 %v144
    %491 = vmatprep.subr.mxu0 %v147
    %492 = vmatpush1.msra.mxu0 %v146
    %493 = vmatprep.subr.mxu0 %v149
    %494 = vmatpush1.msra.mxu0 %v148
    %495 = vmatprep.subr.mxu0 %v151
    %496 = vmatpush1.msra.mxu0 %v150
    %497 = vmatprep.subr.mxu0 %v153
    %498 = vmatpush1.msra.mxu0 %v152
    %499 = vmatprep.subr.mxu0 %v155
    %500 = vmatpush1.msra.mxu0 %v154
    %501 = vmatprep.subr.mxu0 %v157
    %502 = vmatpush1.msra.mxu0 %v156
    %503 = vmatprep.subr.mxu0 %v159
    %504 = vmatpush1.msra.mxu0 %v158
    %505 = vmatprep.subr.mxu0 %v161
    %506 = vmatpush1.msra.mxu0 %v160
    %507 = vmatprep.subr.mxu0 %v163
    %508 = vmatpush1.msra.mxu0 %v162
    %509 = vmatprep.subr.mxu0 %v165
    %510 = vmatpush1.msra.mxu0 %v164
    %511 = vmatprep.subr.mxu0 %v167
    %512 = vmatpush1.msra.mxu0 %v166
    %513 = vmatprep.subr.mxu0 %v169
    %514 = vmatpush1.msra.mxu0 %v168
    %515 = vmatprep.subr.mxu0 %v171
    %516 = vmatpush1.msra.mxu0 %v170
    %517 = vmatprep.subr.mxu0 %v173
    %518 = vmatpush1.msra.mxu0 %v172
    %519 = vmatprep.subr.mxu0 %v175
    %520 = vmatpush1.msra.mxu0 %v174
    %521 = vmatprep.subr.mxu0 %v177
    %522 = vmatpush1.msra.mxu0 %v176
    %523 = vmatprep.subr.mxu0 %v179
    %524 = vmatpush1.msra.mxu0 %v178
    %525 = vmatprep.subr.mxu0 %v181
    %526 = vmatpush1.msra.mxu0 %v180
    %527 = vmatprep.subr.mxu0 %v183
    %528 = vmatpush1.msra.mxu0 %v182
    %529 = vmatprep.subr.mxu0 %v185
    %530 = vmatpush1.msra.mxu0 %v184
    %531 = vmatprep.subr.mxu0 %v187
    %532 = vmatpush1.msra.mxu0 %v186
    %533 = vmatprep.subr.mxu0 %v189
    %534 = vmatpush1.msra.mxu0 %v188
    %535 = vmatprep.subr.mxu0 %v191
    %536 = vmatpush1.msra.mxu0 %v190
    %537 = vmatprep.subr.mxu0 %v193
    %538 = vmatpush1.msra.mxu0 %v192
    %539 = vmatprep.subr.mxu0 %v195
    %540 = vmatpush1.msra.mxu0 %v194
    %541 = vmatprep.subr.mxu0 %v197
    %542 = vmatpush1.msra.mxu0 %v196
    %543 = vmatprep.subr.mxu0 %v199
    %544 = vmatpush1.msra.mxu0 %v198
    %545 = vmatprep.subr.mxu0 %v201
    %546 = vmatpush1.msra.mxu0 %v200
    %547 = vmatprep.mubr.f32.mxu0 %v57
    %548 = vmatmul.mubr.f32.gmra.mrb[0].mxu0 %v56
    %v549 = vpop.f32.mrb[0].mxu0
    %v550 = vadd.f32 %v473, %v549
    %v551 = vpop.f32.mrb[0].mxu0
    %v552 = vadd.f32 %v475, %v551
    %553 = vmatprep.mubr.f32.mxu0 %v67
    %554 = vmatmul.mubr.f32.gmra.mrb[0].mxu0 %v66
    %v555 = vpop.f32.mrb[0].mxu0
    %v556 = vadd.f32 %v479, %v555
    %v557 = vpop.f32.mrb[0].mxu0
    %v558 = vadd.f32 %v481, %v557
    %559 = vdwg.mxu0
    %560 = vmatprep.subr.mxu0 %v203
    %561 = vmatpush1.msra.mxu0 %v202
    %562 = vmatprep.subr.mxu0 %v205
    %563 = vmatpush1.msra.mxu0 %v204
    %564 = vmatprep.subr.mxu0 %v207
    %565 = vmatpush1.msra.mxu0 %v206
    %566 = vmatprep.subr.mxu0 %v209
    %567 = vmatpush1.msra.mxu0 %v208
    %568 = vmatprep.subr.mxu0 %v211
    %569 = vmatpush1.msra.mxu0 %v210
    %570 = vmatprep.subr.mxu0 %v213
    %571 = vmatpush1.msra.mxu0 %v212
    %572 = vmatprep.subr.mxu0 %v215
    %573 = vmatpush1.msra.mxu0 %v214
    %574 = vmatprep.subr.mxu0 %v217
    %575 = vmatpush1.msra.mxu0 %v216
    %576 = vmatprep.subr.mxu0 %v219
    %577 = vmatpush1.msra.mxu0 %v218
    %578 = vmatprep.subr.mxu0 %v221
    %579 = vmatpush1.msra.mxu0 %v220
    %580 = vmatprep.subr.mxu0 %v223
    %581 = vmatpush1.msra.mxu0 %v222
    %582 = vmatprep.subr.mxu0 %v225
    %583 = vmatpush1.msra.mxu0 %v224
    %584 = vmatprep.subr.mxu0 %v227
    %585 = vmatpush1.msra.mxu0 %v226
    %586 = vmatprep.subr.mxu0 %v229
    %587 = vmatpush1.msra.mxu0 %v228
    %588 = vmatprep.subr.mxu0 %v231
    %589 = vmatpush1.msra.mxu0 %v230
    %590 = vmatprep.subr.mxu0 %v233
    %591 = vmatpush1.msra.mxu0 %v232
    %592 = vmatprep.subr.mxu0 %v235
    %593 = vmatpush1.msra.mxu0 %v234
    %594 = vmatprep.subr.mxu0 %v237
    %595 = vmatpush1.msra.mxu0 %v236
    %596 = vmatprep.subr.mxu0 %v239
    %597 = vmatpush1.msra.mxu0 %v238
    %598 = vmatprep.subr.mxu0 %v241
    %599 = vmatpush1.msra.mxu0 %v240
    %600 = vmatprep.subr.mxu0 %v243
    %601 = vmatpush1.msra.mxu0 %v242
    %602 = vmatprep.subr.mxu0 %v245
    %603 = vmatpush1.msra.mxu0 %v244
    %604 = vmatprep.subr.mxu0 %v247
    %605 = vmatpush1.msra.mxu0 %v246
    %606 = vmatprep.subr.mxu0 %v249
    %607 = vmatpush1.msra.mxu0 %v248
    %608 = vmatprep.subr.mxu0 %v251
    %609 = vmatpush1.msra.mxu0 %v250
    %610 = vmatprep.subr.mxu0 %v253
    %611 = vmatpush1.msra.mxu0 %v252
    %612 = vmatprep.subr.mxu0 %v255
    %613 = vmatpush1.msra.mxu0 %v254
    %614 = vmatprep.subr.mxu0 %v257
    %615 = vmatpush1.msra.mxu0 %v256
    %616 = vmatprep.subr.mxu0 %v259
    %617 = vmatpush1.msra.mxu0 %v258
    %618 = vmatprep.subr.mxu0 %v261
    %619 = vmatpush1.msra.mxu0 %v260
    %620 = vmatprep.subr.mxu0 %v263
    %621 = vmatpush1.msra.mxu0 %v262
    %622 = vmatprep.subr.mxu0 %v265
    %623 = vmatpush1.msra.mxu0 %v264
    %624 = vmatprep.mubr.f32.mxu0 %v59
    %625 = vmatmul.mubr.f32.gmra.mrb[0].mxu0 %v58
    %v626 = vpop.f32.mrb[0].mxu0
    %v627 = vadd.f32 %v550, %v626
    %v628 = vpop.f32.mrb[0].mxu0
    %v629 = vadd.f32 %v552, %v628
    %630 = vmatprep.mubr.f32.mxu0 %v69
    %631 = vmatmul.mubr.f32.gmra.mrb[0].mxu0 %v68
    %v632 = vpop.f32.mrb[0].mxu0
    %v633 = vadd.f32 %v556, %v632
    %v634 = vpop.f32.mrb[0].mxu0
    %v635 = vadd.f32 %v558, %v634
    %636 = vdwg.mxu0
    %637 = vmatprep.subr.mxu0 %v267
    %638 = vmatpush1.msra.mxu0 %v266
    %639 = vmatprep.subr.mxu0 %v269
    %640 = vmatpush1.msra.mxu0 %v268
    %641 = vmatprep.subr.mxu0 %v271
    %642 = vmatpush1.msra.mxu0 %v270
    %643 = vmatprep.subr.mxu0 %v273
    %644 = vmatpush1.msra.mxu0 %v272
    %645 = vmatprep.subr.mxu0 %v275
    %646 = vmatpush1.msra.mxu0 %v274
    %647 = vmatprep.subr.mxu0 %v277
    %648 = vmatpush1.msra.mxu0 %v276
    %649 = vmatprep.subr.mxu0 %v279
    %650 = vmatpush1.msra.mxu0 %v278
    %651 = vmatprep.subr.mxu0 %v281
    %652 = vmatpush1.msra.mxu0 %v280
    %653 = vmatprep.subr.mxu0 %v283
    %654 = vmatpush1.msra.mxu0 %v282
    %655 = vmatprep.subr.mxu0 %v285
    %656 = vmatpush1.msra.mxu0 %v284
    %657 = vmatprep.subr.mxu0 %v287
    %658 = vmatpush1.msra.mxu0 %v286
    %659 = vmatprep.subr.mxu0 %v289
    %660 = vmatpush1.msra.mxu0 %v288
    %661 = vmatprep.subr.mxu0 %v291
    %662 = vmatpush1.msra.mxu0 %v290
    %663 = vmatprep.subr.mxu0 %v293
    %664 = vmatpush1.msra.mxu0 %v292
    %665 = vmatprep.subr.mxu0 %v295
    %666 = vmatpush1.msra.mxu0 %v294
    %667 = vmatprep.subr.mxu0 %v297
    %668 = vmatpush1.msra.mxu0 %v296
    %669 = vmatprep.subr.mxu0 %v299
    %670 = vmatpush1.msra.mxu0 %v298
    %671 = vmatprep.subr.mxu0 %v301
    %672 = vmatpush1.msra.mxu0 %v300
    %673 = vmatprep.subr.mxu0 %v303
    %674 = vmatpush1.msra.mxu0 %v302
    %675 = vmatprep.subr.mxu0 %v305
    %676 = vmatpush1.msra.mxu0 %v304
    %677 = vmatprep.subr.mxu0 %v307
    %678 = vmatpush1.msra.mxu0 %v306
    %679 = vmatprep.subr.mxu0 %v309
    %680 = vmatpush1.msra.mxu0 %v308
    %681 = vmatprep.subr.mxu0 %v311
    %682 = vmatpush1.msra.mxu0 %v310
    %683 = vmatprep.subr.mxu0 %v313
    %684 = vmatpush1.msra.mxu0 %v312
    %685 = vmatprep.subr.mxu0 %v315
    %686 = vmatpush1.msra.mxu0 %v314
    %687 = vmatprep.subr.mxu0 %v317
    %688 = vmatpush1.msra.mxu0 %v316
    %689 = vmatprep.subr.mxu0 %v319
    %690 = vmatpush1.msra.mxu0 %v318
    %691 = vmatprep.subr.mxu0 %v321
    %692 = vmatpush1.msra.mxu0 %v320
    %693 = vmatprep.subr.mxu0 %v323
    %694 = vmatpush1.msra.mxu0 %v322
    %695 = vmatprep.subr.mxu0 %v325
    %696 = vmatpush1.msra.mxu0 %v324
    %697 = vmatprep.subr.mxu0 %v327
    %698 = vmatpush1.msra.mxu0 %v326
    %699 = vmatprep.subr.mxu0 %v329
    %700 = vmatpush1.msra.mxu0 %v328
    %701 = vmatprep.mubr.f32.mxu0 %v61
    %702 = vmatmul.mubr.f32.gmra.mrb[0].mxu0 %v60
    %v703 = vpop.f32.mrb[0].mxu0
    %v704 = vadd.f32 %v627, %v703
    %v705 = vpop.f32.mrb[0].mxu0
    %v706 = vadd.f32 %v629, %v705
    %707 = vmatprep.mubr.f32.mxu0 %v71
    %708 = vmatmul.mubr.f32.gmra.mrb[0].mxu0 %v70
    %v709 = vpop.f32.mrb[0].mxu0
    %v710 = vadd.f32 %v633, %v709
    %v711 = vpop.f32.mrb[0].mxu0
    %v712 = vadd.f32 %v635, %v711
    %713 = vdwg.mxu0
    %714 = vmatprep.subr.mxu0 %v331
    %715 = vmatpush1.msra.mxu0 %v330
    %716 = vmatprep.subr.mxu0 %v333
    %717 = vmatpush1.msra.mxu0 %v332
    %718 = vmatprep.subr.mxu0 %v335
    %719 = vmatpush1.msra.mxu0 %v334
    %720 = vmatprep.subr.mxu0 %v337
    %721 = vmatpush1.msra.mxu0 %v336
    %722 = vmatprep.subr.mxu0 %v339
    %723 = vmatpush1.msra.mxu0 %v338
    %724 = vmatprep.subr.mxu0 %v341
    %725 = vmatpush1.msra.mxu0 %v340
    %726 = vmatprep.subr.mxu0 %v343
    %727 = vmatpush1.msra.mxu0 %v342
    %728 = vmatprep.subr.mxu0 %v345
    %729 = vmatpush1.msra.mxu0 %v344
    %730 = vmatprep.subr.mxu0 %v347
    %731 = vmatpush1.msra.mxu0 %v346
    %732 = vmatprep.subr.mxu0 %v349
    %733 = vmatpush1.msra.mxu0 %v348
    %734 = vmatprep.subr.mxu0 %v351
    %735 = vmatpush1.msra.mxu0 %v350
    %736 = vmatprep.subr.mxu0 %v353
    %737 = vmatpush1.msra.mxu0 %v352
    %738 = vmatprep.subr.mxu0 %v355
    %739 = vmatpush1.msra.mxu0 %v354
    %740 = vmatprep.subr.mxu0 %v357
    %741 = vmatpush1.msra.mxu0 %v356
    %742 = vmatprep.subr.mxu0 %v359
    %743 = vmatpush1.msra.mxu0 %v358
    %744 = vmatprep.subr.mxu0 %v361
    %745 = vmatpush1.msra.mxu0 %v360
    %746 = vmatprep.subr.mxu0 %v363
    %747 = vmatpush1.msra.mxu0 %v362
    %748 = vmatprep.subr.mxu0 %v365
    %749 = vmatpush1.msra.mxu0 %v364
    %750 = vmatprep.subr.mxu0 %v367
    %751 = vmatpush1.msra.mxu0 %v366
    %752 = vmatprep.subr.mxu0 %v369
    %753 = vmatpush1.msra.mxu0 %v368
    %754 = vmatprep.subr.mxu0 %v371
    %755 = vmatpush1.msra.mxu0 %v370
    %756 = vmatprep.subr.mxu0 %v373
    %757 = vmatpush1.msra.mxu0 %v372
    %758 = vmatprep.subr.mxu0 %v375
    %759 = vmatpush1.msra.mxu0 %v374
    %760 = vmatprep.subr.mxu0 %v377
    %761 = vmatpush1.msra.mxu0 %v376
    %762 = vmatprep.subr.mxu0 %v379
    %763 = vmatpush1.msra.mxu0 %v378
    %764 = vmatprep.subr.mxu0 %v381
    %765 = vmatpush1.msra.mxu0 %v380
    %766 = vmatprep.subr.mxu0 %v383
    %767 = vmatpush1.msra.mxu0 %v382
    %768 = vmatprep.subr.mxu0 %v385
    %769 = vmatpush1.msra.mxu0 %v384
    %770 = vmatprep.subr.mxu0 %v387
    %771 = vmatpush1.msra.mxu0 %v386
    %772 = vmatprep.subr.mxu0 %v389
    %773 = vmatpush1.msra.mxu0 %v388
    %774 = vmatprep.subr.mxu0 %v391
    %775 = vmatpush1.msra.mxu0 %v390
    %776 = vmatprep.subr.mxu0 %v393
    %777 = vmatpush1.msra.mxu0 %v392
    %778 = vmatprep.mubr.f32.mxu0 %v63
    %779 = vmatmul.mubr.f32.gmra.mrb[0].mxu0 %v62
    %v780 = vpop.f32.mrb[0].mxu0
    %v781 = vadd.f32 %v704, %v780
    %v782 = vpop.f32.mrb[0].mxu0
    %v783 = vadd.f32 %v706, %v782
    %784 = vmatprep.mubr.f32.mxu0 %v73
    %785 = vmatmul.mubr.f32.gmra.mrb[0].mxu0 %v72
    %v786 = vpop.f32.mrb[0].mxu0
    %v787 = vadd.f32 %v710, %v786
    %v788 = vpop.f32.mrb[0].mxu0
    %v789 = vadd.f32 %v712, %v788
    %790 = vdwg.mxu0
    %791 = vst [vmem:[#allocation8] sm:$0xff] %v781
    %792 = vst [vmem:[#allocation8 + $0x8] sm:$0xff] %v783
    %793 = vst [vmem:[#allocation8 + $0x10] sm:$0xff] %v787
    %794 = vst [vmem:[#allocation8 + $0x18] sm:$0xff] %v789
    // Predicated region
    $region26: #{attention_model_bak_forward.1} parent=1 // pred_check
      _
    $region27: #{attention_model_bak_forward.1} parent=1 // pred_check_branch
      %796 = sbr.rel (0) target = $region29
    $region28: #{attention_model_bak_forward.1} parent=1 // pred_region
      %s798 = ssub.s32 512, 512
      %799 = vsyncadd [#allocation4], %s798
      %s800 = sshll.u32 [#allocation8], 4
      %s801 = int_to_ptr.vmem [resolvable:$true] %s800
      %806 = dma.vmem_to_hbm [thread:$0]  %s801, 512, %s3, [#allocation4], 256, 256, 16
    $region29: #{attention_model_bak_forward.1} parent=1 // pred_fallthru
      _
    // Predicated region
    $region30: #{attention_model_bak_forward.1} parent=1 // pred_check
      _
    $region31: #{attention_model_bak_forward.1} parent=1 // pred_check_branch
      %808 = sbr.rel (0) target = $region33
    $region32: #{attention_model_bak_forward.1} parent=1 // pred_region
      %809 = dma.done [#allocation4], 512
    $region33: #{attention_model_bak_forward.1} parent=1 // pred_fallthru
      _
    %810 = vsyncpa [#allocation3], 1
    %811 = vsyncpa [#allocation6], 1
    %812 = vsyncpa [#allocation4], 1

</llo_original>
